<compile_context>
chip_gen: v7x
topology: tpu7x:2x2x1
jax: 0.10.0
libtpu: 0.0.40
codegen_flags: <defaults>
</compile_context>

<pallas_src>
import functools

import jax
import jax.numpy as jnp
from jax.experimental import pallas as pl
from jax.experimental.pallas import tpu as pltpu


def _make_unbind_kernel(num_batches):
    """Kernel with one input ref and `num_batches` output refs (the unbind)."""

    def _kernel(x_ref, *o_refs):
        # x_ref: (B, sub, 128); each o_ref: (sub, 128).  Static index -> plain
        # VMEM slice copies, fully lane/sublane dense (no masked stores).
        for i in range(num_batches):
            o_refs[i][...] = x_ref[i]

    return _kernel


@functools.partial(jax.jit, static_argnames=())
def pallas_identity_unbind(x):
    """Pallas implementation of `iter(x)` semantics (fully consumed).

    Single pallas_call, zero grid steps, per-batch outputs emitted directly by
    the kernel via output DMA layout.  Entire wrapper is jitted (one dispatch).
    """
    B = x.shape[0]
    rest_shape = x.shape[1:]
    F = 1
    for d in rest_shape:
        F *= d
    # Dense vreg packing: each batch slice becomes (F//128, 128).  For the
    # reference shape (4,16,16) -> F = 1024 -> (8, 128): exactly one dense
    # f32 vreg per slice, unmasked vld/vst.
    assert F % 128 == 0, "flattened feature size must be lane-aligned (128)"
    sub = F // 128

    x3 = x.reshape(B, sub, 128)

    vmem_spec = pl.BlockSpec(memory_space=pltpu.MemorySpace.VMEM)

    outs = pl.pallas_call(
        _make_unbind_kernel(B),
        out_shape=tuple(
            jax.ShapeDtypeStruct((sub, 128), x.dtype) for _ in range(B)
        ),
        # No grid: one step, whole 8 KiB tensor resident in VMEM.
        in_specs=[vmem_spec],
        out_specs=tuple(vmem_spec for _ in range(B)),
    )(x3)

    # Equivalent of list(iter(x)): the kernel already produced the per-batch
    # slices; only a (free, fused-under-jit) reshape back to rest_shape.
    return tuple(o.reshape(rest_shape) for o in outs)


if __name__ == "__main__":
    key = jax.random.PRNGKey(0)
    x = jax.random.normal(key, (2, 4, 16, 16), dtype=jnp.float32)

    slices = pallas_identity_unbind(x)
    slices = jax.block_until_ready(slices)

    # Sanity check: consuming the "iterator" must reproduce x[i] exactly.
    assert len(slices) == x.shape[0]
    for i, s in enumerate(slices):
        assert s.shape == (4, 16, 16)
        assert bool(jnp.array_equal(s, x[i]))

    print("KERNEL_OK")
</pallas_src>

<mosaic_0001>
module attributes {stable_mosaic.version = 11 : i64} {
  func.func @_kernel(%arg0: memref<2x8x128xf32, #tpu.memory_space<vmem>>, %arg1: memref<8x128xf32, #tpu.memory_space<vmem>>, %arg2: memref<8x128xf32, #tpu.memory_space<vmem>>) attributes {dimension_semantics = [], scalar_prefetch = 0 : i64, scratch_operands = 0 : i64, tpu.core_type = #tpu.core_type<tc>} {
    %c0 = arith.constant 0 : index
    %c0_0 = arith.constant 0 : index
    %c0_1 = arith.constant 0 : index
    %0 = vector.load %arg0[%c0, %c0_0, %c0_1] : memref<2x8x128xf32, #tpu.memory_space<vmem>>, vector<1x8x128xf32>
    %1 = vector.shape_cast %0 : vector<1x8x128xf32> to vector<8x128xf32>
    %c0_2 = arith.constant 0 : index
    %c0_3 = arith.constant 0 : index
    %2 = vector.load %arg1[%c0_2, %c0_3] : memref<8x128xf32, #tpu.memory_space<vmem>>, vector<8x128xf32>
    tpu.vector_store %arg1[%c0_2, %c0_3], %1 {strides = array<i32>} : memref<8x128xf32, #tpu.memory_space<vmem>>, vector<8x128xf32>,
    %c1 = arith.constant 1 : index
    %c0_4 = arith.constant 0 : index
    %c0_5 = arith.constant 0 : index
    %3 = vector.load %arg0[%c1, %c0_4, %c0_5] : memref<2x8x128xf32, #tpu.memory_space<vmem>>, vector<1x8x128xf32>
    %4 = vector.shape_cast %3 : vector<1x8x128xf32> to vector<8x128xf32>
    %c0_6 = arith.constant 0 : index
    %c0_7 = arith.constant 0 : index
    %5 = vector.load %arg2[%c0_6, %c0_7] : memref<8x128xf32, #tpu.memory_space<vmem>>, vector<8x128xf32>
    tpu.vector_store %arg2[%c0_6, %c0_7], %4 {strides = array<i32>} : memref<8x128xf32, #tpu.memory_space<vmem>>, vector<8x128xf32>,
    return
  }
}

</mosaic_0001>

<llo_original>
// kernel: pallas_identity_unbind.1
$region0: #{pallas_identity_unbind.1}
  #allocation0 [shape = 'u32[]', space=smem, size = 0x4, offset = 0x4, fixed_abs, tag = 'smem constant byte address 0x4 - core index']
  #allocation1 [shape = 'u32[144,128]{1,0:T(1,128)}', space=vmem, size = 0x12000, scoped, tag = 'internal scratch']
  %s0 = inlined_call_operand.vmem [shape: f32[2,8,128], index: 0, kind: input, shape index: {}]
  %s1 = inlined_call_operand.vmem [shape: f32[8,128], index: 1, kind: output, shape index: {0}]
  %s2 = inlined_call_operand.vmem [shape: f32[8,128], index: 2, kind: output, shape index: {1}]
  %3 = xla_tuple %s1, %s2
  %s4 = sld [smem:[#allocation0]]
  $region22: #{pallas_identity_unbind.1} parent=0
    _
  %s6 = ssub.s32 1, %s4
  %s7 = scalar_select 0, %s6, %s4
  // Predicated region
  $region2: #{pallas_identity_unbind.1} parent=0 // pred_check
    _
  $region3: #{pallas_identity_unbind.1} parent=0 // pred_check_branch
    %9 = sbr.rel (0) target = $region5
  $region4: #{pallas_identity_unbind.1} parent=0 // pred_region
    _
  $region5: #{pallas_identity_unbind.1} parent=0 // pred_fallthru
    _
  %v10 = vld [vmem:[%s0] sm:$0xff]
  %11 = vst [vmem:[%s1] sm:$0xff] %v10
  %s12 = scalar_lea.vmem %s0, 8
  %v13 = vld [vmem:[%s12] sm:$0xff]
  %14 = vst [vmem:[%s2] sm:$0xff] %v13
  // Predicated region
  $region6: #{pallas_identity_unbind.1} parent=0 // pred_check
    _
  $region7: #{pallas_identity_unbind.1} parent=0 // pred_check_branch
    %16 = sbr.rel (0) target = $region9
  $region8: #{pallas_identity_unbind.1} parent=0 // pred_region
    _
  $region9: #{pallas_identity_unbind.1} parent=0 // pred_fallthru
    _
  // Predicated region
  $region10: #{pallas_identity_unbind.1} parent=0 // pred_check
    _
  $region11: #{pallas_identity_unbind.1} parent=0 // pred_check_branch
    %18 = sbr.rel (0) target = $region13
  $region12: #{pallas_identity_unbind.1} parent=0 // pred_region
    _
  $region13: #{pallas_identity_unbind.1} parent=0 // pred_fallthru
    _
  // Predicated region
  $region14: #{pallas_identity_unbind.1} parent=0 // pred_check
    _
  $region15: #{pallas_identity_unbind.1} parent=0 // pred_check_branch
    %20 = sbr.rel (0) target = $region17
  $region16: #{pallas_identity_unbind.1} parent=0 // pred_region
    _
  $region17: #{pallas_identity_unbind.1} parent=0 // pred_fallthru
    _
  // Predicated region
  $region18: #{pallas_identity_unbind.1} parent=0 // pred_check
    _
  $region19: #{pallas_identity_unbind.1} parent=0 // pred_check_branch
    %22 = sbr.rel (0) target = $region21
  $region20: #{pallas_identity_unbind.1} parent=0 // pred_region
    _
  $region21: #{pallas_identity_unbind.1} parent=0 // pred_fallthru
    _

</llo_original>
